<compile_context>
chip_gen: v5e
topology: v5e:2x2
jax: 0.10.0
libtpu: 0.0.40
codegen_flags: <defaults>
</compile_context>

<pallas_src>
import functools

import jax
import jax.numpy as jnp
from jax.experimental import pallas as pl
from jax.experimental.pallas import tpu as pltpu

N_EMB = 64
HIDDEN = 4 * N_EMB
DROPOUT_P = 0.2
# keep iff bits >= floor(p * 2^32)  =>  P(keep) = 1 - p, exactly, in integers.
_DROP_THRESHOLD = int(DROPOUT_P * (1 << 32))
_KEEP_SCALE = 1.0 / (1.0 - DROPOUT_P)


def _ffn_math(x_ref, w1_ref, b1_ref, w2_ref, b2_ref):
    """relu(x @ W1 + b1) @ W2 + b2 with bf16 MXU operands, f32 accumulation."""
    h = jnp.dot(x_ref[...], w1_ref[...],
                preferred_element_type=jnp.float32) + b1_ref[...]
    h = jnp.maximum(h, 0.0)
    # TODO(synk): if a bundle dump ever shows vreg spills at large tiles on
    # v5e, strip-mine HIDDEN into 128-wide blocks here.
    y = jnp.dot(h.astype(jnp.bfloat16), w2_ref[...],
                preferred_element_type=jnp.float32) + b2_ref[...]
    return y


def _ffn_kernel_eval(x_ref, w1_ref, b1_ref, w2_ref, b2_ref, o_ref):
    """Inference path: dropout is identity."""
    y = _ffn_math(x_ref, w1_ref, b1_ref, w2_ref, b2_ref)
    o_ref[...] = y.astype(o_ref.dtype)


def _ffn_kernel_train(x_ref, w1_ref, b1_ref, w2_ref, b2_ref, bits_ref, o_ref):
    """Training path: inverted dropout via integer-threshold mask."""
    y = _ffn_math(x_ref, w1_ref, b1_ref, w2_ref, b2_ref)
    keep = bits_ref[...] >= jnp.uint32(_DROP_THRESHOLD)
    y = jnp.where(keep, y * _KEEP_SCALE, 0.0)
    o_ref[...] = y.astype(o_ref.dtype)


@functools.partial(jax.jit, static_argnames=("training",))
def feed_forward(x, w1, b1, w2, b2, key=None, *, training=False):
    """x: (B, T, n_emb) float32. Returns (B, T, n_emb) float32."""
    B, T, E = x.shape
    assert E == N_EMB
    M = B * T

    # ---- tiling ---------------------------------------------------------
    # Large row tiles amortize per-step pipeline overhead and the masked
    # 64-lane output stores.  Cap at 512 so (a) the per-step VMEM footprint
    # (<1.5 MiB incl. double-buffering) is far under every generation's
    # scoped VMEM limit (v5e 16 MiB / v6e 32 MiB / v7x 32 of 64 MiB) and
    # (b) M > 512 yields >= 2 parallel grid steps for v7x's two TensorCores.
    TM_MAX = 512
    tm = M if M <= TM_MAX else TM_MAX
    n_blocks = pl.cdiv(M, tm)
    Mp = n_blocks * tm

    x2d = x.reshape(M, E)
    if Mp != M:
        x2d = jnp.pad(x2d, ((0, Mp - M), (0, 0)))

    # bf16 operands for the MXU (accumulation stays f32 inside the kernel).
    x_bf = x2d.astype(jnp.bfloat16)
    w1_bf = w1.astype(jnp.bfloat16)
    w2_bf = w2.astype(jnp.bfloat16)
    b1_2d = b1.reshape(1, HIDDEN).astype(jnp.float32)
    b2_2d = b2.reshape(1, E).astype(jnp.float32)

    grid = (n_blocks,)
    data_in_specs = [
        pl.BlockSpec((tm, E), lambda i: (i, 0)),         # x rows
        pl.BlockSpec((E, HIDDEN), lambda i: (0, 0)),     # W1 (resident)
        pl.BlockSpec((1, HIDDEN), lambda i: (0, 0)),     # b1
        pl.BlockSpec((HIDDEN, E), lambda i: (0, 0)),     # W2 (resident)
        pl.BlockSpec((1, E), lambda i: (0, 0)),          # b2
    ]
    out_spec = pl.BlockSpec((tm, E), lambda i: (i, 0))
    out_shape = jax.ShapeDtypeStruct((Mp, E), jnp.float32)

    flops = 4 * Mp * E * HIDDEN                          # two matmuls
    bytes_accessed = (x_bf.size * 2 + w1_bf.size * 2 + w2_bf.size * 2
                      + b1_2d.size * 4 + b2_2d.size * 4 + Mp * E * 4)

    if training:
        if key is None:
            key = jax.random.PRNGKey(0)
        bits = jax.random.bits(key, (Mp, E), dtype=jnp.uint32)
        kernel = _ffn_kernel_train
        in_specs = data_in_specs + [pl.BlockSpec((tm, E), lambda i: (i, 0))]
        args = (x_bf, w1_bf, b1_2d, w2_bf, b2_2d, bits)
        bytes_accessed += bits.size * 4
    else:
        kernel = _ffn_kernel_eval
        in_specs = data_in_specs
        args = (x_bf, w1_bf, b1_2d, w2_bf, b2_2d)

    y2d = pl.pallas_call(
        kernel,
        out_shape=out_shape,
        grid=grid,
        in_specs=in_specs,
        out_specs=out_spec,
        compiler_params=pltpu.CompilerParams(
            dimension_semantics=("parallel",)),
        cost_estimate=pl.CostEstimate(
            flops=flops, transcendentals=0, bytes_accessed=bytes_accessed),
    )(*args)
    return y2d[:M].reshape(B, T, E)


def _init_params(key, n_emb):
    """Deterministic init mimicking nn.Linear (uniform(-1/sqrt(fan_in), +))."""
    k1, k2, k3, k4 = jax.random.split(key, 4)
    bound1 = 1.0 / jnp.sqrt(n_emb)
    bound2 = 1.0 / jnp.sqrt(4 * n_emb)
    w1 = jax.random.uniform(k1, (n_emb, 4 * n_emb), jnp.float32, -bound1, bound1)
    b1 = jax.random.uniform(k2, (4 * n_emb,), jnp.float32, -bound1, bound1)
    w2 = jax.random.uniform(k3, (4 * n_emb, n_emb), jnp.float32, -bound2, bound2)
    b2 = jax.random.uniform(k4, (n_emb,), jnp.float32, -bound2, bound2)
    return w1, b1, w2, b2


if __name__ == "__main__":
    key = jax.random.PRNGKey(0)
    k_x, k_p, k_drop = jax.random.split(key, 3)

    B, T = 2, 8  # small batch / sequence; feature dim fixed by module (n_emb=64)
    x = jax.random.normal(k_x, (B, T, N_EMB), jnp.float32)
    w1, b1, w2, b2 = _init_params(k_p, N_EMB)

    # ---- inference (dropout = identity), matching eval() semantics -------
    y = feed_forward(x, w1, b1, w2, b2, training=False)
    jax.block_until_ready(y)

    # Plain-JAX reference of the same bf16-operand / f32-accumulate math.
    x2d = x.reshape(-1, N_EMB)
    h_ref = jnp.maximum(
        jnp.dot(x2d.astype(jnp.bfloat16), w1.astype(jnp.bfloat16),
                preferred_element_type=jnp.float32) + b1, 0.0)
    ref = jnp.dot(h_ref.astype(jnp.bfloat16), w2.astype(jnp.bfloat16),
                  preferred_element_type=jnp.float32) + b2
    assert jnp.allclose(y.reshape(-1, N_EMB), ref, atol=1e-2, rtol=1e-2), \
        "eval output mismatch vs reference"

    # ---- training (dropout active) ---------------------------------------
    y_tr = feed_forward(x, w1, b1, w2, b2, k_drop, training=True)
    jax.block_until_ready(y_tr)

    drop_frac = float(jnp.mean(y_tr == 0.0))
    assert 0.05 <= drop_frac <= 0.40, f"implausible dropout fraction {drop_frac}"
    kept = y_tr != 0.0
    assert jnp.allclose(jnp.where(kept, y_tr, 0.0),
                        jnp.where(kept, y * _KEEP_SCALE, 0.0),
                        atol=1e-2, rtol=1e-2), "kept values not scaled by 1/(1-p)"

    print("KERNEL_OK")
</pallas_src>

<mosaic_0001>
module attributes {stable_mosaic.version = 11 : i64} {
  func.func @_ffn_kernel_eval(%arg0: i32, %arg1: memref<16x64xbf16, #tpu.memory_space<vmem>>, %arg2: memref<64x256xbf16, #tpu.memory_space<vmem>>, %arg3: memref<1x256xf32, #tpu.memory_space<vmem>>, %arg4: memref<256x64xbf16, #tpu.memory_space<vmem>>, %arg5: memref<1x64xf32, #tpu.memory_space<vmem>>, %arg6: memref<16x64xf32, #tpu.memory_space<vmem>>) attributes {dimension_semantics = [#tpu.dimension_semantics<parallel>], iteration_bounds = array<i64: 1>, scalar_prefetch = 0 : i64, scratch_operands = 0 : i64, tpu.core_type = #tpu.core_type<tc>, window_params = [{transform_indices = @transform_0, window_bounds = array<i64: 16, 64>}, {pipeline_mode = #tpu.pipeline_mode<synchronous>, transform_indices = @transform_1, window_bounds = array<i64: 64, 256>}, {pipeline_mode = #tpu.pipeline_mode<synchronous>, transform_indices = @transform_2, window_bounds = array<i64: 1, 256>}, {pipeline_mode = #tpu.pipeline_mode<synchronous>, transform_indices = @transform_3, window_bounds = array<i64: 256, 64>}, {pipeline_mode = #tpu.pipeline_mode<synchronous>, transform_indices = @transform_4, window_bounds = array<i64: 1, 64>}, {transform_indices = @transform_5, window_bounds = array<i64: 16, 64>}]} {
    %c0 = arith.constant 0 : index
    %c0_0 = arith.constant 0 : index
    %0 = vector.load %arg1[%c0, %c0_0] : memref<16x64xbf16, #tpu.memory_space<vmem>>, vector<16x64xbf16>
    %c0_1 = arith.constant 0 : index
    %c0_2 = arith.constant 0 : index
    %1 = vector.load %arg2[%c0_1, %c0_2] : memref<64x256xbf16, #tpu.memory_space<vmem>>, vector<64x256xbf16>
    %cst = arith.constant dense<0.000000e+00> : vector<16x256xf32>
    %2 = tpu.matmul %0, %1, %cst {dimension_numbers = #tpu.dot_dimension_numbers<[1], [0], [0], [1], [0, 0, 1, 1], [], []>} : vector<16x64xbf16>, vector<64x256xbf16>, vector<16x256xf32> -> vector<16x256xf32>
    %c0_3 = arith.constant 0 : index
    %c0_4 = arith.constant 0 : index
    %3 = vector.load %arg3[%c0_3, %c0_4] : memref<1x256xf32, #tpu.memory_space<vmem>>, vector<1x256xf32>
    %4 = vector.broadcast %3 : vector<1x256xf32> to vector<16x256xf32>
    %5 = arith.addf %2, %4 : vector<16x256xf32>
    %cst_5 = arith.constant 0.000000e+00 : f32
    %6 = vector.broadcast %cst_5 : f32 to vector<16x256xf32>
    %7 = arith.maximumf %5, %6 : vector<16x256xf32>
    %8 = arith.truncf %7 : vector<16x256xf32> to vector<16x256xbf16>
    %c0_6 = arith.constant 0 : index
    %c0_7 = arith.constant 0 : index
    %9 = vector.load %arg4[%c0_6, %c0_7] : memref<256x64xbf16, #tpu.memory_space<vmem>>, vector<256x64xbf16>
    %cst_8 = arith.constant dense<0.000000e+00> : vector<16x64xf32>
    %10 = tpu.matmul %8, %9, %cst_8 {dimension_numbers = #tpu.dot_dimension_numbers<[1], [0], [0], [1], [0, 0, 1, 1], [], []>} : vector<16x256xbf16>, vector<256x64xbf16>, vector<16x64xf32> -> vector<16x64xf32>
    %c0_9 = arith.constant 0 : index
    %c0_10 = arith.constant 0 : index
    %11 = vector.load %arg5[%c0_9, %c0_10] : memref<1x64xf32, #tpu.memory_space<vmem>>, vector<1x64xf32>
    %12 = vector.broadcast %11 : vector<1x64xf32> to vector<16x64xf32>
    %13 = arith.addf %10, %12 : vector<16x64xf32>
    %c0_11 = arith.constant 0 : index
    %c0_12 = arith.constant 0 : index
    %14 = vector.load %arg6[%c0_11, %c0_12] : memref<16x64xf32, #tpu.memory_space<vmem>>, vector<16x64xf32>
    tpu.vector_store %arg6[%c0_11, %c0_12], %13 {strides = array<i32>} : memref<16x64xf32, #tpu.memory_space<vmem>>, vector<16x64xf32>,
    return
  }
  func.func @transform_0(%arg0: i32) -> (i32, i32) {
    %c0_i32 = arith.constant 0 : i32
    %c0_i32_0 = arith.constant 0 : i32
    return %arg0, %c0_i32 : i32, i32
  }
  func.func @transform_1(%arg0: i32) -> (i32, i32) {
    %c0_i32 = arith.constant 0 : i32
    %c0_i32_0 = arith.constant 0 : i32
    %c0_i32_1 = arith.constant 0 : i32
    return %c0_i32, %c0_i32_0 : i32, i32
  }
  func.func @transform_2(%arg0: i32) -> (i32, i32) {
    %c0_i32 = arith.constant 0 : i32
    %c0_i32_0 = arith.constant 0 : i32
    %c0_i32_1 = arith.constant 0 : i32
    return %c0_i32, %c0_i32_0 : i32, i32
  }
  func.func @transform_3(%arg0: i32) -> (i32, i32) {
    %c0_i32 = arith.constant 0 : i32
    %c0_i32_0 = arith.constant 0 : i32
    %c0_i32_1 = arith.constant 0 : i32
    return %c0_i32, %c0_i32_0 : i32, i32
  }
  func.func @transform_4(%arg0: i32) -> (i32, i32) {
    %c0_i32 = arith.constant 0 : i32
    %c0_i32_0 = arith.constant 0 : i32
    %c0_i32_1 = arith.constant 0 : i32
    return %c0_i32, %c0_i32_0 : i32, i32
  }
  func.func @transform_5(%arg0: i32) -> (i32, i32) {
    %c0_i32 = arith.constant 0 : i32
    %c0_i32_0 = arith.constant 0 : i32
    return %arg0, %c0_i32 : i32, i32
  }
}

</mosaic_0001>

<llo_original>
// kernel: feed_forward.1
$region0: #{feed_forward.1}
  #allocation0 [shape = 'u32[]', space=smem, size = 0x4, offset = 0x4, fixed_abs, tag = 'smem constant byte address 0x4 - core index']
  #allocation1 [shape = 'u32[72,128]{1,0:T(1,128)}', space=vmem, size = 0x9000, scoped, tag = 'internal scratch']
  %s0 = inlined_call_operand.vmem [shape: bf16[16,64], index: 0, kind: input, shape index: {}]
  %s1 = inlined_call_operand.vmem [shape: bf16[64,256], index: 1, kind: input, shape index: {}]
  %s2 = inlined_call_operand.vmem [shape: f32[1,256], index: 2, kind: input, shape index: {}]
  %s3 = inlined_call_operand.vmem [shape: bf16[256,64], index: 3, kind: input, shape index: {}]
  %s4 = inlined_call_operand.vmem [shape: f32[1,64], index: 4, kind: input, shape index: {}]
  %s5 = inlined_call_operand.hbm [shape: f32[16,64], index: 5, kind: output, shape index: {}]
  %s6 = sld [smem:[#allocation0]]
  $region30: #{feed_forward.1} parent=0
    _
  %s8 = ssub.s32 1, %s6
  %s9 = scalar_select 0, %s8, %s6
  $region1: #{feed_forward.1} parent=0
    #allocation2 [shape = 'u8[8192]{0}', space=vmem, size = 0x2000, scoped, tag = 'output window, operand 0, single buffered']
    #allocation3 [shape = 's32[1]{0}', space=sflag, size = 0x4, scoped, tag = 'scoped memory for feed_forward.1']
    %10 = vsyncpa [#allocation3], 0
    // Predicated region
    $region2: #{feed_forward.1} parent=1 // pred_check
      _
    $region3: #{feed_forward.1} parent=1 // pred_check_branch
      %12 = sbr.rel (0) target = $region5
    $region4: #{feed_forward.1} parent=1 // pred_region
      _
    $region5: #{feed_forward.1} parent=1 // pred_fallthru
      _
    // Predicated region
    $region6: #{feed_forward.1} parent=1 // pred_check
      _
    $region7: #{feed_forward.1} parent=1 // pred_check_branch
      %14 = sbr.rel (0) target = $region9
    $region8: #{feed_forward.1} parent=1 // pred_region
      _
    $region9: #{feed_forward.1} parent=1 // pred_fallthru
      _
    // Predicated region
    $region10: #{feed_forward.1} parent=1 // pred_check
      _
    $region11: #{feed_forward.1} parent=1 // pred_check_branch
      %16 = sbr.rel (0) target = $region13
    $region12: #{feed_forward.1} parent=1 // pred_region
      _
    $region13: #{feed_forward.1} parent=1 // pred_fallthru
      _
    // Predicated region
    $region14: #{feed_forward.1} parent=1 // pred_check
      _
    $region15: #{feed_forward.1} parent=1 // pred_check_branch
      %18 = sbr.rel (0) target = $region17
    $region16: #{feed_forward.1} parent=1 // pred_region
      _
    $region17: #{feed_forward.1} parent=1 // pred_fallthru
      _
    // Predicated region
    $region18: #{feed_forward.1} parent=1 // pred_check
      _
    $region19: #{feed_forward.1} parent=1 // pred_check_branch
      %20 = sbr.rel (0) target = $region21
    $region20: #{feed_forward.1} parent=1 // pred_region
      _
    $region21: #{feed_forward.1} parent=1 // pred_fallthru
      _
    %v22 = vld [vmem:[%s0] sm:$0xf]
    %v23 = vld [vmem:[%s0 + $0x4] sm:$0xf]
    %v24 = vld [vmem:[%s1] sm:$0xff]
    %v25 = vld [vmem:[%s1 + $0x8] sm:$0xff]
    %v26 = vld [vmem:[%s1 + $0x10] sm:$0xff]
    %v27 = vld [vmem:[%s1 + $0x18] sm:$0xff]
    %v28 = vld [vmem:[%s1 + $0x20] sm:$0xff]
    %v29 = vld [vmem:[%s1 + $0x28] sm:$0xff]
    %v30 = vld [vmem:[%s1 + $0x30] sm:$0xff]
    %v31 = vld [vmem:[%s1 + $0x38] sm:$0xff]
    %v32 = vld [vmem:[%s2] sm:$0x3]
    %v34 = vperm.slane %v32, 0
    %v35 = vperm.slane %v32, 1
    %v40 = vunpack.c.l.b16 %v22
    %v41 = vunpack.c.l.b16 %v23
    %v42 = vpack.c.b16 %v41, %v40
    %v51 = vunpack.c.l.b16 %v24
    %v52 = vunpack.c.h.b16 %v24
    %v53 = vunpack.c.l.b16 %v25
    %v54 = vunpack.c.h.b16 %v25
    %v55 = vunpack.c.l.b16 %v26
    %v56 = vunpack.c.h.b16 %v26
    %v57 = vunpack.c.l.b16 %v27
    %v58 = vunpack.c.h.b16 %v27
    %v59 = vunpack.c.l.b16 %v28
    %v60 = vunpack.c.h.b16 %v28
    %v61 = vunpack.c.l.b16 %v29
    %v62 = vunpack.c.h.b16 %v29
    %v63 = vunpack.c.l.b16 %v30
    %v64 = vunpack.c.h.b16 %v30
    %v65 = vunpack.c.l.b16 %v31
    %v66 = vunpack.c.h.b16 %v31
    %v67 = vpack.c.b16 %v53, %v51
    %v68 = vpack.c.b16 %v54, %v52
    %v69 = vpack.c.b16 %v57, %v55
    %v70 = vpack.c.b16 %v58, %v56
    %v71 = vpack.c.b16 %v61, %v59
    %v72 = vpack.c.b16 %v62, %v60
    %v73 = vpack.c.b16 %v65, %v63
    %v74 = vpack.c.b16 %v66, %v64
    %vm83 = vcmask 523264
    %v85 = vsel %vm83, %v42, 0
    %87 = vmatpush.bf16.msra.mxu0 0
    %88 = vmatpush.bf16.msra.mxu0 0
    %89 = vmatpush.bf16.msra.mxu0 0
    %90 = vmatpush.bf16.msra.mxu0 0
    %91 = vmatpush.bf16.msra.mxu0 %v73
    %92 = vmatpush.bf16.msra.mxu0 %v71
    %93 = vmatpush.bf16.msra.mxu0 %v69
    %94 = vmatpush.bf16.msra.mxu0 %v67
    %95 = vmatmul.bf16.gmra.mxu0 %v85
    %v96 = vpop.f32.mrf.mxu0
    %v97 = vadd.f32 %v34, %v96
    %v98 = vpop.f32.mrf.mxu0
    %v99 = vadd.f32 %v34, %v98
    %100 = vdwg.mxu0
    %101 = vmatpush.bf16.msra.mxu0 0
    %102 = vmatpush.bf16.msra.mxu0 0
    %103 = vmatpush.bf16.msra.mxu0 0
    %104 = vmatpush.bf16.msra.mxu0 0
    %105 = vmatpush.bf16.msra.mxu0 %v74
    %106 = vmatpush.bf16.msra.mxu0 %v72
    %107 = vmatpush.bf16.msra.mxu0 %v70
    %108 = vmatpush.bf16.msra.mxu0 %v68
    %109 = vmatmul.bf16.gmra.mxu0 %v85
    %v110 = vpop.f32.mrf.mxu0
    %v111 = vadd.f32 %v35, %v110
    %v112 = vpop.f32.mrf.mxu0
    %v113 = vadd.f32 %v35, %v112
    %114 = vdwg.mxu0
    %v115 = vmax.f32 %v97, 0.0
    %v116 = vmax.f32 %v111, 0.0
    %v117 = vmax.f32 %v99, 0.0
    %v118 = vmax.f32 %v113, 0.0
    %v119 = vpack.c.bf16 %v117, %v115
    %v120 = vpack.c.bf16 %v118, %v116
    %v121 = vld [vmem:[%s3] sm:$0xf]
    %v122 = vld [vmem:[%s3 + $0x4] sm:$0xf]
    %v123 = vld [vmem:[%s3 + $0x8] sm:$0xf]
    %v124 = vld [vmem:[%s3 + $0xc] sm:$0xf]
    %v125 = vld [vmem:[%s3 + $0x10] sm:$0xf]
    %v126 = vld [vmem:[%s3 + $0x14] sm:$0xf]
    %v127 = vld [vmem:[%s3 + $0x18] sm:$0xf]
    %v128 = vld [vmem:[%s3 + $0x1c] sm:$0xf]
    %v129 = vld [vmem:[%s3 + $0x20] sm:$0xf]
    %v130 = vld [vmem:[%s3 + $0x24] sm:$0xf]
    %v131 = vld [vmem:[%s3 + $0x28] sm:$0xf]
    %v132 = vld [vmem:[%s3 + $0x2c] sm:$0xf]
    %v133 = vld [vmem:[%s3 + $0x30] sm:$0xf]
    %v134 = vld [vmem:[%s3 + $0x34] sm:$0xf]
    %v135 = vld [vmem:[%s3 + $0x38] sm:$0xf]
    %v136 = vld [vmem:[%s3 + $0x3c] sm:$0xf]
    %v137 = vld [vmem:[%s3 + $0x40] sm:$0xf]
    %v138 = vld [vmem:[%s3 + $0x44] sm:$0xf]
    %v139 = vld [vmem:[%s3 + $0x48] sm:$0xf]
    %v140 = vld [vmem:[%s3 + $0x4c] sm:$0xf]
    %v141 = vld [vmem:[%s3 + $0x50] sm:$0xf]
    %v142 = vld [vmem:[%s3 + $0x54] sm:$0xf]
    %v143 = vld [vmem:[%s3 + $0x58] sm:$0xf]
    %v144 = vld [vmem:[%s3 + $0x5c] sm:$0xf]
    %v145 = vld [vmem:[%s3 + $0x60] sm:$0xf]
    %v146 = vld [vmem:[%s3 + $0x64] sm:$0xf]
    %v147 = vld [vmem:[%s3 + $0x68] sm:$0xf]
    %v148 = vld [vmem:[%s3 + $0x6c] sm:$0xf]
    %v149 = vld [vmem:[%s3 + $0x70] sm:$0xf]
    %v150 = vld [vmem:[%s3 + $0x74] sm:$0xf]
    %v151 = vld [vmem:[%s3 + $0x78] sm:$0xf]
    %v152 = vld [vmem:[%s3 + $0x7c] sm:$0xf]
    %v153 = vld [vmem:[%s4] sm:$0x1]
    %v155 = vperm.slane %v153, 0
    %v189 = vunpack.c.l.b16 %v121
    %v190 = vunpack.c.l.b16 %v122
    %v191 = vunpack.c.l.b16 %v123
    %v192 = vunpack.c.l.b16 %v124
    %v193 = vunpack.c.l.b16 %v125
    %v194 = vunpack.c.l.b16 %v126
    %v195 = vunpack.c.l.b16 %v127
    %v196 = vunpack.c.l.b16 %v128
    %v197 = vunpack.c.l.b16 %v129
    %v198 = vunpack.c.l.b16 %v130
    %v199 = vunpack.c.l.b16 %v131
    %v200 = vunpack.c.l.b16 %v132
    %v201 = vunpack.c.l.b16 %v133
    %v202 = vunpack.c.l.b16 %v134
    %v203 = vunpack.c.l.b16 %v135
    %v204 = vunpack.c.l.b16 %v136
    %v205 = vunpack.c.l.b16 %v137
    %v206 = vunpack.c.l.b16 %v138
    %v207 = vunpack.c.l.b16 %v139
    %v208 = vunpack.c.l.b16 %v140
    %v209 = vunpack.c.l.b16 %v141
    %v210 = vunpack.c.l.b16 %v142
    %v211 = vunpack.c.l.b16 %v143
    %v212 = vunpack.c.l.b16 %v144
    %v213 = vunpack.c.l.b16 %v145
    %v214 = vunpack.c.l.b16 %v146
    %v215 = vunpack.c.l.b16 %v147
    %v216 = vunpack.c.l.b16 %v148
    %v217 = vunpack.c.l.b16 %v149
    %v218 = vunpack.c.l.b16 %v150
    %v219 = vunpack.c.l.b16 %v151
    %v220 = vunpack.c.l.b16 %v152
    %v221 = vpack.c.b16 %v190, %v189
    %v222 = vpack.c.b16 %v192, %v191
    %v223 = vpack.c.b16 %v194, %v193
    %v224 = vpack.c.b16 %v196, %v195
    %v225 = vpack.c.b16 %v198, %v197
    %v226 = vpack.c.b16 %v200, %v199
    %v227 = vpack.c.b16 %v202, %v201
    %v228 = vpack.c.b16 %v204, %v203
    %v229 = vpack.c.b16 %v206, %v205
    %v230 = vpack.c.b16 %v208, %v207
    %v231 = vpack.c.b16 %v210, %v209
    %v232 = vpack.c.b16 %v212, %v211
    %v233 = vpack.c.b16 %v214, %v213
    %v234 = vpack.c.b16 %v216, %v215
    %v235 = vpack.c.b16 %v218, %v217
    %v236 = vpack.c.b16 %v220, %v219
    %253 = vmatpush.bf16.msra.mxu0 %v228
    %254 = vmatpush.bf16.msra.mxu0 %v227
    %255 = vmatpush.bf16.msra.mxu0 %v226
    %256 = vmatpush.bf16.msra.mxu0 %v225
    %257 = vmatpush.bf16.msra.mxu0 %v224
    %258 = vmatpush.bf16.msra.mxu0 %v223
    %259 = vmatpush.bf16.msra.mxu0 %v222
    %260 = vmatpush.bf16.msra.mxu0 %v221
    %261 = vmatmul.bf16.gmra.mxu0 %v119
    %v262 = vpop.f32.mrf.mxu0
    %v263 = vadd.f32 %v155, %v262
    %v264 = vpop.f32.mrf.mxu0
    %v265 = vadd.f32 %v155, %v264
    %266 = vdwg.mxu0
    %267 = vmatpush.bf16.msra.mxu0 %v236
    %268 = vmatpush.bf16.msra.mxu0 %v235
    %269 = vmatpush.bf16.msra.mxu0 %v234
    %270 = vmatpush.bf16.msra.mxu0 %v233
    %271 = vmatpush.bf16.msra.mxu0 %v232
    %272 = vmatpush.bf16.msra.mxu0 %v231
    %273 = vmatpush.bf16.msra.mxu0 %v230
    %274 = vmatpush.bf16.msra.mxu0 %v229
    %275 = vmatmul.bf16.gmra.mxu0 %v120
    %v276 = vpop.f32.mrf.mxu0
    %v277 = vadd.f32 %v263, %v276
    %v278 = vpop.f32.mrf.mxu0
    %v279 = vadd.f32 %v265, %v278
    %280 = vdwg.mxu0
    %281 = vst.msk [vmem:[#allocation2] sm:$0xff] %vm83, %v277
    %282 = vst.msk [vmem:[#allocation2 + $0x8] sm:$0xff] %vm83, %v279
    // Predicated region
    $region22: #{feed_forward.1} parent=1 // pred_check
      _
    $region23: #{feed_forward.1} parent=1 // pred_check_branch
      %284 = sbr.rel (0) target = $region25
    $region24: #{feed_forward.1} parent=1 // pred_region
      %286 = vsyncadd [#allocation3], 0
      %s287 = sshll.u32 [#allocation2], 4
      %s288 = int_to_ptr.vmem [resolvable:$true] %s287
      %s289 = sshll.u32 %s5, 4
      %s290 = int_to_ptr.hbm [resolvable:$true] %s289
      %295 = dma.vmem_to_hbm [thread:$0]  %s288, 256, %s290, [#allocation3], 128, 128, 8
    $region25: #{feed_forward.1} parent=1 // pred_fallthru
      _
    // Predicated region
    $region26: #{feed_forward.1} parent=1 // pred_check
      _
    $region27: #{feed_forward.1} parent=1 // pred_check_branch
      %297 = sbr.rel (0) target = $region29
    $region28: #{feed_forward.1} parent=1 // pred_region
      %299 = dma.done [#allocation3], 256
    $region29: #{feed_forward.1} parent=1 // pred_fallthru
      _
    %300 = vsyncpa [#allocation3], 1

</llo_original>
